<compile_context>
chip_gen: v6e
topology: v6e:2x2x1
jax: 0.10.0
libtpu: 0.0.40
codegen_flags: <defaults>
</compile_context>

<pallas_src>
import functools

import jax
import jax.numpy as jnp
import numpy as np
from jax.experimental import pallas as pl
from jax.experimental.pallas import tpu as pltpu


def _default_gate_dtype():
    """bf16 sigmoid/tanh on v6e/v7x (bf16 EUP path); f32 on v5e (no bf16 EUP)."""
    try:
        kind = jax.devices()[0].device_kind.lower()
    except Exception:
        return jnp.float32
    return jnp.float32 if "v5" in kind else jnp.bfloat16


def _lstm_step(x_bf16, h, c, m, w_bf16, bias, gate_dtype):
    """One LSTM-cell update on VMEM-resident values.

    x_bf16: (tb, I) bf16, h/c: (tb, H) f32, m: (tb, 1) f32,
    w_bf16: (I+H, 4H) bf16, bias: (1, 4H) f32.  Returns (h1, c1), both f32.
    """
    H = h.shape[-1]
    # Single K = I+H MXU dot.  With I and H multiples of 128 the lane concat is
    # whole-vreg copies (no XLU relayout); accumulation stays f32 on the MXU.
    xh = jnp.concatenate([x_bf16, h.astype(jnp.bfloat16)], axis=-1)
    pre = jnp.dot(xh, w_bf16, preferred_element_type=jnp.float32) + bias

    # Lane-tile-aligned gate slices as long as H % 128 == 0.
    f = pre[:, 0 * H:1 * H].astype(gate_dtype)
    i = pre[:, 1 * H:2 * H].astype(gate_dtype)
    o = pre[:, 2 * H:3 * H].astype(gate_dtype)
    g = pre[:, 3 * H:4 * H].astype(gate_dtype)

    c1 = jax.nn.sigmoid(f) * c + (jax.nn.sigmoid(i) * jnp.tanh(g)).astype(jnp.float32)
    c1 = c1 * m + c * (1.0 - m)            # exact linear blend (fractional masks OK)
    h1 = jax.nn.sigmoid(o) * jnp.tanh(c1)
    h1 = h1 * m + h * (1.0 - m)
    return h1, c1


def lstm_cell_kernel(x_ref, h0_ref, c0_ref, mask_ref, w_ref, b_ref,
                     h1_ref, c1_ref, *, gate_dtype):
    h1, c1 = _lstm_step(x_ref[...].astype(jnp.bfloat16), h0_ref[...],
                        c0_ref[...], mask_ref[...], w_ref[...], b_ref[...],
                        gate_dtype)
    h1_ref[...] = h1.astype(h1_ref.dtype)
    c1_ref[...] = c1.astype(c1_ref.dtype)


def lstm_seq_kernel(x_ref, mask_ref, h0_ref, c0_ref, w_ref, b_ref,
                    h_ref, c_ref, *, gate_dtype):
    # h_ref/c_ref use a constant output index_map, so they stay VMEM-resident
    # across the whole time grid and double as the recurrent-state carry.
    @pl.when(pl.program_id(0) == 0)
    def _():
        h_ref[...] = h0_ref[...]
        c_ref[...] = c0_ref[...]

    h1, c1 = _lstm_step(x_ref[0].astype(jnp.bfloat16), h_ref[...], c_ref[...],
                        mask_ref[0], w_ref[...], b_ref[...], gate_dtype)
    h_ref[...] = h1.astype(h_ref.dtype)
    c_ref[...] = c1.astype(c_ref.dtype)


def prepare_lstm_params(w, bias_f, bias_iog):
    """One-time parameter prep (hoist out of any per-timestep loop).

    w: (4H, I+H) torch-style Linear weight  ->  (I+H, 4H) bf16 matmul operand.
    bias: concatenated [bias_f, bias_iog] as a (1, 4H) f32 row.
    """
    w_bf16 = jnp.transpose(w).astype(jnp.bfloat16)
    b = jnp.concatenate([bias_f, bias_iog])[None, :].astype(jnp.float32)
    return w_bf16, b


def _pick_batch_tile(B, block_b):
    """Batch tile: multiple of 8 (ideally 128); prefer >= 2 tiles at large B so
    the "parallel" axis can shard across v7x's two TensorCores."""
    if B > block_b:
        assert B % block_b == 0, "demo wrapper assumes B % block_b == 0"
        return block_b
    half = B // 2
    if half >= 128 and half % 128 == 0:
        return half
    return B


def _vmem_limit_bytes(I, H, tb):
    f32, bf16 = 4, 2
    weights = (I + H) * 4 * H * bf16 + 4 * H * f32
    tiles = tb * (I + 4 * H + 6 * H + 1) * f32          # x, pre, h/c in+out, mask
    est = 2 * (2 * weights + 2 * tiles)                 # double-buffering + headroom
    return int(min(max(est, 32 * 2 ** 20), 64 * 2 ** 20))


def lstm_cell_forward(x, h0, c0, mask, w_bf16, b, *, block_b=512,
                      gate_dtype=None):
    """Single LSTM-cell step (matches LSTMCell.forward).

    x: (B, I), h0/c0: (B, H) or None, mask: (B,) or None,
    w_bf16/b: outputs of prepare_lstm_params.  Returns (h1, c1), f32 (B, H).
    """
    B, I = x.shape
    H = b.shape[-1] // 4
    assert I % 128 == 0 and H % 128 == 0, "pad I/H to multiples of 128"
    assert B % 8 == 0, "pad B to a multiple of 8"
    if h0 is None:
        h0 = jnp.zeros((B, H), jnp.float32)
    if c0 is None:
        c0 = jnp.zeros((B, H), jnp.float32)
    if mask is None:
        mask = jnp.ones((B,), jnp.float32)
    if gate_dtype is None:
        gate_dtype = _default_gate_dtype()

    # x stays f32 here: the bf16 cast happens on the VPU inside the kernel
    # (a wrapper-side cast would be an extra un-fused HBM read+write pass).
    x = x.astype(jnp.float32)
    h0 = h0.astype(jnp.float32)
    c0 = c0.astype(jnp.float32)
    mask2d = mask[:, None].astype(jnp.float32)

    tb = _pick_batch_tile(B, block_b)
    grid = (B // tb,)

    batch_blk = lambda *bs: pl.BlockSpec(bs, lambda i: (i, 0))
    resident = lambda *bs: pl.BlockSpec(bs, lambda i: (0, 0))   # VMEM-resident
    # TODO(synk): single-buffer the resident weight specs (pipeline_mode=
    # pl.Buffered(1)) once that is honored by the top-level TPU pipeline, to
    # halve the weight VMEM footprint on v7x (64 MiB / TC).
    # TODO(synk): for very large H (resident weights near the VMEM budget,
    # esp. v7x), add a grid axis over 4H with gate-aligned N-tiles of the
    # weight so the elementwise gate math stays lane-aligned per tile.

    h1, c1 = pl.pallas_call(
        functools.partial(lstm_cell_kernel, gate_dtype=gate_dtype),
        out_shape=(jax.ShapeDtypeStruct((B, H), jnp.float32),
                   jax.ShapeDtypeStruct((B, H), jnp.float32)),
        grid=grid,
        in_specs=[
            batch_blk(tb, I),            # x (f32, cast to bf16 in-kernel)
            batch_blk(tb, H),            # h0
            batch_blk(tb, H),            # c0
            batch_blk(tb, 1),            # mask
            resident(I + H, 4 * H),      # fused weight (bf16), reused across tiles
            resident(1, 4 * H),          # bias (f32)
        ],
        out_specs=(batch_blk(tb, H), batch_blk(tb, H)),
        compiler_params=pltpu.CompilerParams(
            dimension_semantics=("parallel",),
            vmem_limit_bytes=_vmem_limit_bytes(I, H, tb)),
    )(x, h0, c0, mask2d, w_bf16, b)
    return h1, c1


def lstm_sequence_forward(xs, masks, h0, c0, w_bf16, b, *, gate_dtype=None):
    """Fused T-step recurrence: weights DMA'd once, state carried in VMEM.

    xs: (T, B, I), masks: (T, B), h0/c0: (B, H).  Returns final (h_T, c_T).
    """
    T, B, I = xs.shape
    H = h0.shape[-1]
    assert I % 128 == 0 and H % 128 == 0 and B % 8 == 0
    if gate_dtype is None:
        gate_dtype = _default_gate_dtype()

    xs = xs.astype(jnp.float32)
    masks3d = masks[:, :, None].astype(jnp.float32)
    h0 = h0.astype(jnp.float32)
    c0 = c0.astype(jnp.float32)

    step_blk = lambda *bs: pl.BlockSpec(bs, lambda t: (t,) + (0,) * (len(bs) - 1))
    resident = lambda *bs: pl.BlockSpec(bs, lambda t: (0,) * len(bs))

    # TODO(synk): alias h0/c0 to the outputs via input_output_aliases to update
    # the recurrent state fully in place when the caller donates its buffers.
    h1, c1 = pl.pallas_call(
        functools.partial(lstm_seq_kernel, gate_dtype=gate_dtype),
        out_shape=(jax.ShapeDtypeStruct((B, H), jnp.float32),
                   jax.ShapeDtypeStruct((B, H), jnp.float32)),
        grid=(T,),
        in_specs=[
            step_blk(1, B, I),           # x_t
            step_blk(1, B, 1),           # mask_t
            resident(B, H),              # h0 (read once at t == 0)
            resident(B, H),              # c0
            resident(I + H, 4 * H),      # fused weight (bf16), DMA'd once per call
            resident(1, 4 * H),          # bias
        ],
        out_specs=(resident(B, H), resident(B, H)),   # VMEM-resident state carry
        compiler_params=pltpu.CompilerParams(
            dimension_semantics=("arbitrary",),       # sequential recurrence
            vmem_limit_bytes=_vmem_limit_bytes(I, H, B)),
    )(xs, masks3d, h0, c0, w_bf16, b)
    return h1, c1


def lstm_cell_ref(x, h0, c0, mask, w, bias_f, bias_iog):
    """Pure-JAX f32 reference mirroring the PyTorch forward."""
    pre_act = jnp.concatenate([x, h0], -1) @ w.T
    pre_act = pre_act + jnp.concatenate([bias_f, bias_iog])[None, :]
    H = h0.shape[-1]
    f, i, o, g = (pre_act[:, k * H:(k + 1) * H] for k in range(4))
    m = mask[:, None]
    c1 = jax.nn.sigmoid(f) * c0 + jax.nn.sigmoid(i) * jnp.tanh(g)
    c1 = c1 * m + c0 * (1 - m)
    h1 = jax.nn.sigmoid(o) * jnp.tanh(c1)
    h1 = h1 * m + h0 * (1 - m)
    return h1, c1


if __name__ == "__main__":
    # H = I = 128 keeps gate slices / outputs lane-aligned; B = 8 sublane-aligned.
    B, I, H, T = 8, 128, 128, 4

    key = jax.random.PRNGKey(0)
    kx, kh, kc, km, kw, kxs, kms = jax.random.split(key, 7)

    x = jax.random.normal(kx, (B, I), dtype=jnp.float32)
    h0 = jax.random.normal(kh, (B, H), dtype=jnp.float32)
    c0 = jax.random.normal(kc, (B, H), dtype=jnp.float32)
    mask = (jax.random.uniform(km, (B,)) > 0.3).astype(jnp.float32)

    # Deterministic Xavier-uniform init for the (4H, I+H) Linear weight.
    fan_in, fan_out = I + H, 4 * H
    limit = float(np.sqrt(6.0 / (fan_in + fan_out)))
    w = jax.random.uniform(kw, (4 * H, I + H), minval=-limit, maxval=limit,
                           dtype=jnp.float32)
    bias_f = jnp.ones((H,), dtype=jnp.float32)          # reset_parameters: fill_(1.0)
    bias_iog = jnp.zeros((3 * H,), dtype=jnp.float32)   # fill_(0.0)

    # One-time parameter prep (lives outside any scan over timesteps).
    w_bf16, b = prepare_lstm_params(w, bias_f, bias_iog)

    # --- single step (matches LSTMCell.forward) ------------------------------
    h1, c1 = lstm_cell_forward(x, h0, c0, mask, w_bf16, b)
    jax.block_until_ready((h1, c1))
    h1_ref, c1_ref = lstm_cell_ref(x, h0, c0, mask, w, bias_f, bias_iog)
    np.testing.assert_allclose(np.asarray(h1), np.asarray(h1_ref),
                               rtol=3e-2, atol=3e-2)
    np.testing.assert_allclose(np.asarray(c1), np.asarray(c1_ref),
                               rtol=3e-2, atol=3e-2)

    # --- fused T-step recurrence (weights DMA'd once, no per-step launches) --
    xs = jax.random.normal(kxs, (T, B, I), dtype=jnp.float32)
    masks = (jax.random.uniform(kms, (T, B)) > 0.3).astype(jnp.float32)
    hT, cT = lstm_sequence_forward(xs, masks, h0, c0, w_bf16, b)
    jax.block_until_ready((hT, cT))

    h_r, c_r = h0, c0
    for t in range(T):
        h_r, c_r = lstm_cell_ref(xs[t], h_r, c_r, masks[t], w, bias_f, bias_iog)
    np.testing.assert_allclose(np.asarray(hT), np.asarray(h_r),
                               rtol=5e-2, atol=5e-2)
    np.testing.assert_allclose(np.asarray(cT), np.asarray(c_r),
                               rtol=5e-2, atol=5e-2)

    print("KERNEL_OK")
</pallas_src>

<mosaic_0001>
module attributes {stable_mosaic.version = 11 : i64} {
  func.func @lstm_cell_kernel(%arg0: i32, %arg1: memref<8x128xf32, #tpu.memory_space<vmem>>, %arg2: memref<8x128xf32, #tpu.memory_space<vmem>>, %arg3: memref<8x128xf32, #tpu.memory_space<vmem>>, %arg4: memref<8x1xf32, #tpu.memory_space<vmem>>, %arg5: memref<256x512xbf16, #tpu.memory_space<vmem>>, %arg6: memref<1x512xf32, #tpu.memory_space<vmem>>, %arg7: memref<8x128xf32, #tpu.memory_space<vmem>>, %arg8: memref<8x128xf32, #tpu.memory_space<vmem>>) attributes {dimension_semantics = [#tpu.dimension_semantics<parallel>], iteration_bounds = array<i64: 1>, scalar_prefetch = 0 : i64, scratch_operands = 0 : i64, tpu.core_type = #tpu.core_type<tc>, window_params = [{transform_indices = @transform_0, window_bounds = array<i64: 8, 128>}, {transform_indices = @transform_1, window_bounds = array<i64: 8, 128>}, {transform_indices = @transform_2, window_bounds = array<i64: 8, 128>}, {transform_indices = @transform_3, window_bounds = array<i64: 8, 1>}, {pipeline_mode = #tpu.pipeline_mode<synchronous>, transform_indices = @transform_4, window_bounds = array<i64: 256, 512>}, {pipeline_mode = #tpu.pipeline_mode<synchronous>, transform_indices = @transform_5, window_bounds = array<i64: 1, 512>}, {transform_indices = @transform_6, window_bounds = array<i64: 8, 128>}, {transform_indices = @transform_7, window_bounds = array<i64: 8, 128>}]} {
    %c0 = arith.constant 0 : index
    %c0_0 = arith.constant 0 : index
    %0 = vector.load %arg1[%c0, %c0_0] : memref<8x128xf32, #tpu.memory_space<vmem>>, vector<8x128xf32>
    %1 = arith.truncf %0 : vector<8x128xf32> to vector<8x128xbf16>
    %c0_1 = arith.constant 0 : index
    %c0_2 = arith.constant 0 : index
    %2 = vector.load %arg2[%c0_1, %c0_2] : memref<8x128xf32, #tpu.memory_space<vmem>>, vector<8x128xf32>
    %c0_3 = arith.constant 0 : index
    %c0_4 = arith.constant 0 : index
    %3 = vector.load %arg3[%c0_3, %c0_4] : memref<8x128xf32, #tpu.memory_space<vmem>>, vector<8x128xf32>
    %c0_5 = arith.constant 0 : index
    %c0_6 = arith.constant 0 : index
    %4 = vector.load %arg4[%c0_5, %c0_6] : memref<8x1xf32, #tpu.memory_space<vmem>>, vector<8x1xf32>
    %c0_7 = arith.constant 0 : index
    %c0_8 = arith.constant 0 : index
    %5 = vector.load %arg5[%c0_7, %c0_8] : memref<256x512xbf16, #tpu.memory_space<vmem>>, vector<256x512xbf16>
    %c0_9 = arith.constant 0 : index
    %c0_10 = arith.constant 0 : index
    %6 = vector.load %arg6[%c0_9, %c0_10] : memref<1x512xf32, #tpu.memory_space<vmem>>, vector<1x512xf32>
    %7 = arith.truncf %2 : vector<8x128xf32> to vector<8x128xbf16>
    %8 = tpu.concatenate %1, %7 in 1 : vector<8x128xbf16>, vector<8x128xbf16> -> vector<8x256xbf16>
    %cst = arith.constant dense<0.000000e+00> : vector<8x512xf32>
    %9 = tpu.matmul %8, %5, %cst {dimension_numbers = #tpu.dot_dimension_numbers<[1], [0], [0], [1], [0, 0, 1, 1], [], []>} : vector<8x256xbf16>, vector<256x512xbf16>, vector<8x512xf32> -> vector<8x512xf32>
    %10 = vector.broadcast %6 : vector<1x512xf32> to vector<8x512xf32>
    %11 = arith.addf %9, %10 : vector<8x512xf32>
    %12 = vector.extract_strided_slice %11 {offsets = [0, 0], sizes = [8, 128], strides = [1, 1]} : vector<8x512xf32> to vector<8x128xf32>
    %13 = arith.truncf %12 : vector<8x128xf32> to vector<8x128xbf16>
    %14 = vector.extract_strided_slice %11 {offsets = [0, 128], sizes = [8, 128], strides = [1, 1]} : vector<8x512xf32> to vector<8x128xf32>
    %15 = arith.truncf %14 : vector<8x128xf32> to vector<8x128xbf16>
    %16 = vector.extract_strided_slice %11 {offsets = [0, 256], sizes = [8, 128], strides = [1, 1]} : vector<8x512xf32> to vector<8x128xf32>
    %17 = arith.truncf %16 : vector<8x128xf32> to vector<8x128xbf16>
    %18 = vector.extract_strided_slice %11 {offsets = [0, 384], sizes = [8, 128], strides = [1, 1]} : vector<8x512xf32> to vector<8x128xf32>
    %19 = arith.truncf %18 : vector<8x128xf32> to vector<8x128xbf16>
    %20 = arith.negf %13 : vector<8x128xbf16>
    %21 = math.exp %20 : vector<8x128xbf16>
    %cst_11 = arith.constant 1.000000e+00 : bf16
    %22 = vector.broadcast %cst_11 : bf16 to vector<8x128xbf16>
    %23 = arith.addf %22, %21 : vector<8x128xbf16>
    %24 = arith.divf %22, %23 : vector<8x128xbf16>
    %25 = arith.extf %24 : vector<8x128xbf16> to vector<8x128xf32>
    %26 = arith.mulf %25, %3 : vector<8x128xf32>
    %27 = arith.negf %15 : vector<8x128xbf16>
    %28 = math.exp %27 : vector<8x128xbf16>
    %cst_12 = arith.constant 1.000000e+00 : bf16
    %29 = vector.broadcast %cst_12 : bf16 to vector<8x128xbf16>
    %30 = arith.addf %29, %28 : vector<8x128xbf16>
    %31 = arith.divf %29, %30 : vector<8x128xbf16>
    %32 = math.tanh %19 : vector<8x128xbf16>
    %33 = arith.mulf %31, %32 : vector<8x128xbf16>
    %34 = arith.extf %33 : vector<8x128xbf16> to vector<8x128xf32>
    %35 = arith.addf %26, %34 : vector<8x128xf32>
    %36 = vector.broadcast %4 : vector<8x1xf32> to vector<8x128xf32>
    %37 = arith.mulf %35, %36 : vector<8x128xf32>
    %cst_13 = arith.constant 1.000000e+00 : f32
    %38 = vector.broadcast %cst_13 : f32 to vector<8x1xf32>
    %39 = arith.subf %38, %4 : vector<8x1xf32>
    %40 = vector.broadcast %39 : vector<8x1xf32> to vector<8x128xf32>
    %41 = arith.mulf %3, %40 : vector<8x128xf32>
    %42 = arith.addf %37, %41 : vector<8x128xf32>
    %43 = arith.negf %17 : vector<8x128xbf16>
    %44 = math.exp %43 : vector<8x128xbf16>
    %cst_14 = arith.constant 1.000000e+00 : bf16
    %45 = vector.broadcast %cst_14 : bf16 to vector<8x128xbf16>
    %46 = arith.addf %45, %44 : vector<8x128xbf16>
    %47 = arith.divf %45, %46 : vector<8x128xbf16>
    %48 = math.tanh %42 : vector<8x128xf32>
    %49 = arith.extf %47 : vector<8x128xbf16> to vector<8x128xf32>
    %50 = arith.mulf %49, %48 : vector<8x128xf32>
    %51 = vector.broadcast %4 : vector<8x1xf32> to vector<8x128xf32>
    %52 = arith.mulf %50, %51 : vector<8x128xf32>
    %cst_15 = arith.constant 1.000000e+00 : f32
    %53 = vector.broadcast %cst_15 : f32 to vector<8x1xf32>
    %54 = arith.subf %53, %4 : vector<8x1xf32>
    %55 = vector.broadcast %54 : vector<8x1xf32> to vector<8x128xf32>
    %56 = arith.mulf %2, %55 : vector<8x128xf32>
    %57 = arith.addf %52, %56 : vector<8x128xf32>
    %c0_16 = arith.constant 0 : index
    %c0_17 = arith.constant 0 : index
    %58 = vector.load %arg7[%c0_16, %c0_17] : memref<8x128xf32, #tpu.memory_space<vmem>>, vector<8x128xf32>
    tpu.vector_store %arg7[%c0_16, %c0_17], %57 {strides = array<i32>} : memref<8x128xf32, #tpu.memory_space<vmem>>, vector<8x128xf32>,
    %c0_18 = arith.constant 0 : index
    %c0_19 = arith.constant 0 : index
    %59 = vector.load %arg8[%c0_18, %c0_19] : memref<8x128xf32, #tpu.memory_space<vmem>>, vector<8x128xf32>
    tpu.vector_store %arg8[%c0_18, %c0_19], %42 {strides = array<i32>} : memref<8x128xf32, #tpu.memory_space<vmem>>, vector<8x128xf32>,
    return
  }
  func.func @transform_0(%arg0: i32) -> (i32, i32) {
    %c0_i32 = arith.constant 0 : i32
    %c0_i32_0 = arith.constant 0 : i32
    return %arg0, %c0_i32 : i32, i32
  }
  func.func @transform_1(%arg0: i32) -> (i32, i32) {
    %c0_i32 = arith.constant 0 : i32
    %c0_i32_0 = arith.constant 0 : i32
    return %arg0, %c0_i32 : i32, i32
  }
  func.func @transform_2(%arg0: i32) -> (i32, i32) {
    %c0_i32 = arith.constant 0 : i32
    %c0_i32_0 = arith.constant 0 : i32
    return %arg0, %c0_i32 : i32, i32
  }
  func.func @transform_3(%arg0: i32) -> (i32, i32) {
    %c0_i32 = arith.constant 0 : i32
    %c0_i32_0 = arith.constant 0 : i32
    return %arg0, %c0_i32 : i32, i32
  }
  func.func @transform_4(%arg0: i32) -> (i32, i32) {
    %c0_i32 = arith.constant 0 : i32
    %c0_i32_0 = arith.constant 0 : i32
    %c0_i32_1 = arith.constant 0 : i32
    return %c0_i32, %c0_i32_0 : i32, i32
  }
  func.func @transform_5(%arg0: i32) -> (i32, i32) {
    %c0_i32 = arith.constant 0 : i32
    %c0_i32_0 = arith.constant 0 : i32
    %c0_i32_1 = arith.constant 0 : i32
    return %c0_i32, %c0_i32_0 : i32, i32
  }
  func.func @transform_6(%arg0: i32) -> (i32, i32) {
    %c0_i32 = arith.constant 0 : i32
    %c0_i32_0 = arith.constant 0 : i32
    return %arg0, %c0_i32 : i32, i32
  }
  func.func @transform_7(%arg0: i32) -> (i32, i32) {
    %c0_i32 = arith.constant 0 : i32
    %c0_i32_0 = arith.constant 0 : i32
    return %arg0, %c0_i32 : i32, i32
  }
}

</mosaic_0001>

<llo_original>
// kernel: tpu_custom_call.1
$region0: #{tpu_custom_call.1}
  #allocation0 [shape = 'u32[]', space=smem, size = 0x4, offset = 0x4, fixed_abs, tag = 'smem constant byte address 0x4 - core index']
  #allocation1 [shape = 'u32[144,128]{1,0:T(1,128)}', space=vmem, size = 0x12000, scoped, tag = 'internal scratch']
  %s0 = inlined_call_operand.vmem [shape: f32[8,128], index: 0, kind: input, shape index: {}]
  %s1 = inlined_call_operand.hbm [shape: f32[8,128], index: 1, kind: input, shape index: {}]
  %s2 = inlined_call_operand.hbm [shape: f32[8,128], index: 2, kind: input, shape index: {}]
  %s3 = inlined_call_operand.vmem [shape: f32[8,1], index: 3, kind: input, shape index: {}]
  %s4 = inlined_call_operand.hbm [shape: bf16[256,512], index: 4, kind: input, shape index: {}]
  %s5 = inlined_call_operand.vmem [shape: f32[1,512], index: 5, kind: input, shape index: {}]
  %s6 = inlined_call_operand.hbm [shape: f32[8,128], index: 6, kind: output, shape index: {0}]
  %s7 = inlined_call_operand.hbm [shape: f32[8,128], index: 7, kind: output, shape index: {1}]
  %8 = xla_tuple %s6, %s7
  %s9 = sld [smem:[#allocation0]]
  $region54: #{tpu_custom_call.1} parent=0
    _
  %s11 = ssub.s32 1, %s9
  %s12 = scalar_select 0, %s11, %s9
  $region1: #{tpu_custom_call.1} parent=0
    #allocation2 [shape = 'u8[4096]{0}', space=vmem, size = 0x1000, scoped, tag = 'input window, operand 1, single buffered']
    #allocation3 [shape = 's32[1]{0}', space=sflag, size = 0x4, scoped, tag = 'scoped memory for tpu_custom_call.1']
    #allocation4 [shape = 's32[1]{0}', space=sflag, size = 0x4, scoped, tag = 'scoped memory for tpu_custom_call.1']
    #allocation5 [shape = 'u8[4096]{0}', space=vmem, size = 0x1000, scoped, tag = 'input window, operand 2, single buffered']
    #allocation6 [shape = 's32[1]{0}', space=sflag, size = 0x4, scoped, tag = 'scoped memory for tpu_custom_call.1']
    #allocation7 [shape = 'u8[262144]{0}', space=vmem, size = 0x40000, scoped, tag = 'input window, operand 4, single buffered']
    #allocation8 [shape = 'u8[4096]{0}', space=vmem, size = 0x1000, scoped, tag = 'output window, operand 0, single buffered']
    #allocation9 [shape = 'u8[4096]{0}', space=vmem, size = 0x1000, scoped, tag = 'output window, operand 1, single buffered']
    #allocation10 [shape = 's32[1]{0}', space=sflag, size = 0x4, scoped, tag = 'scoped memory for tpu_custom_call.1']
    %13 = vsyncpa [#allocation3], 0
    %14 = vsyncpa [#allocation6], 0
    %15 = vsyncpa [#allocation4], 0
    %16 = vsyncpa [#allocation10], 0
    // Predicated region
    $region2: #{tpu_custom_call.1} parent=1 // pred_check
      _
    $region3: #{tpu_custom_call.1} parent=1 // pred_check_branch
      %18 = sbr.rel (0) target = $region5
    $region4: #{tpu_custom_call.1} parent=1 // pred_region
      _
    $region5: #{tpu_custom_call.1} parent=1 // pred_fallthru
      _
    // Predicated region
    $region6: #{tpu_custom_call.1} parent=1 // pred_check
      _
    $region7: #{tpu_custom_call.1} parent=1 // pred_check_branch
      %20 = sbr.rel (0) target = $region9
    $region8: #{tpu_custom_call.1} parent=1 // pred_region
      %s22 = ssub.s32 128, 128
      %23 = vsyncadd [#allocation3], %s22
      %s25 = sshll.u32 [#allocation2], 4
      %s26 = int_to_ptr.vmem [resolvable:$true] %s25
      %28 = dma.hbm_to_vmem [thread:$0]  %s1, 128, %s26, [#allocation3]
    $region9: #{tpu_custom_call.1} parent=1 // pred_fallthru
      _
    // Predicated region
    $region10: #{tpu_custom_call.1} parent=1 // pred_check
      _
    $region11: #{tpu_custom_call.1} parent=1 // pred_check_branch
      %30 = sbr.rel (0) target = $region13
    $region12: #{tpu_custom_call.1} parent=1 // pred_region
      %s32 = ssub.s32 128, 128
      %33 = vsyncadd [#allocation6], %s32
      %s35 = sshll.u32 [#allocation5], 4
      %s36 = int_to_ptr.vmem [resolvable:$true] %s35
      %38 = dma.hbm_to_vmem [thread:$0]  %s2, 128, %s36, [#allocation6]
    $region13: #{tpu_custom_call.1} parent=1 // pred_fallthru
      _
    // Predicated region
    $region14: #{tpu_custom_call.1} parent=1 // pred_check
      _
    $region15: #{tpu_custom_call.1} parent=1 // pred_check_branch
      %40 = sbr.rel (0) target = $region17
    $region16: #{tpu_custom_call.1} parent=1 // pred_region
      _
    $region17: #{tpu_custom_call.1} parent=1 // pred_fallthru
      _
    // Predicated region
    $region18: #{tpu_custom_call.1} parent=1 // pred_check
      _
    $region19: #{tpu_custom_call.1} parent=1 // pred_check_branch
      %42 = sbr.rel (0) target = $region21
    $region20: #{tpu_custom_call.1} parent=1 // pred_region
      %s44 = ssub.s32 8192, 8192
      %45 = vsyncadd [#allocation6], %s44
      %s46 = sshll.u32 [#allocation7], 4
      %s47 = int_to_ptr.vmem [resolvable:$true] %s46
      %52 = dma.hbm_to_vmem [thread:$0]  %s4, 8192, %s47, [#allocation6], 256, 256, 16
    $region21: #{tpu_custom_call.1} parent=1 // pred_fallthru
      _
    // Predicated region
    $region22: #{tpu_custom_call.1} parent=1 // pred_check
      _
    $region23: #{tpu_custom_call.1} parent=1 // pred_check_branch
      %54 = sbr.rel (0) target = $region25
    $region24: #{tpu_custom_call.1} parent=1 // pred_region
      _
    $region25: #{tpu_custom_call.1} parent=1 // pred_fallthru
      _
    // Predicated region
    $region26: #{tpu_custom_call.1} parent=1 // pred_check
      _
    $region27: #{tpu_custom_call.1} parent=1 // pred_check_branch
      %56 = sbr.rel (0) target = $region29
    $region28: #{tpu_custom_call.1} parent=1 // pred_region
      %57 = dma.done [#allocation3], 128
    $region29: #{tpu_custom_call.1} parent=1 // pred_fallthru
      _
    // Predicated region
    $region30: #{tpu_custom_call.1} parent=1 // pred_check
      _
    $region31: #{tpu_custom_call.1} parent=1 // pred_check_branch
      %59 = sbr.rel (0) target = $region33
    $region32: #{tpu_custom_call.1} parent=1 // pred_region
      %60 = dma.done [#allocation6], 128
    $region33: #{tpu_custom_call.1} parent=1 // pred_fallthru
      _
    // Predicated region
    $region34: #{tpu_custom_call.1} parent=1 // pred_check
      _
    $region35: #{tpu_custom_call.1} parent=1 // pred_check_branch
      %62 = sbr.rel (0) target = $region37
    $region36: #{tpu_custom_call.1} parent=1 // pred_region
      %63 = dma.done [#allocation6], 8192
    $region37: #{tpu_custom_call.1} parent=1 // pred_fallthru
      _
    %v65 = vld [vmem:[%s0] sm:$0xff]
    %v66 = vpack.c.bf16 %v65, %v65
    %v67 = vld [vmem:[#allocation2] sm:$0xff]
    %v68 = vld [vmem:[#allocation5] sm:$0xff]
    %v69 = vld [vmem:[%s3] sm:$0xff]
    %v70 = vld [vmem:[#allocation7] sm:$0xff]
    %v71 = vld [vmem:[#allocation7 + $0x8] sm:$0xff]
    %v72 = vld [vmem:[#allocation7 + $0x10] sm:$0xff]
    %v73 = vld [vmem:[#allocation7 + $0x18] sm:$0xff]
    %v74 = vld [vmem:[#allocation7 + $0x20] sm:$0xff]
    %v75 = vld [vmem:[#allocation7 + $0x28] sm:$0xff]
    %v76 = vld [vmem:[#allocation7 + $0x30] sm:$0xff]
    %v77 = vld [vmem:[#allocation7 + $0x38] sm:$0xff]
    %v78 = vld [vmem:[#allocation7 + $0x40] sm:$0xff]
    %v79 = vld [vmem:[#allocation7 + $0x48] sm:$0xff]
    %v80 = vld [vmem:[#allocation7 + $0x50] sm:$0xff]
    %v81 = vld [vmem:[#allocation7 + $0x58] sm:$0xff]
    %v82 = vld [vmem:[#allocation7 + $0x60] sm:$0xff]
    %v83 = vld [vmem:[#allocation7 + $0x68] sm:$0xff]
    %v84 = vld [vmem:[#allocation7 + $0x70] sm:$0xff]
    %v85 = vld [vmem:[#allocation7 + $0x78] sm:$0xff]
    %v86 = vld [vmem:[#allocation7 + $0x80] sm:$0xff]
    %v87 = vld [vmem:[#allocation7 + $0x88] sm:$0xff]
    %v88 = vld [vmem:[#allocation7 + $0x90] sm:$0xff]
    %v89 = vld [vmem:[#allocation7 + $0x98] sm:$0xff]
    %v90 = vld [vmem:[#allocation7 + $0xa0] sm:$0xff]
    %v91 = vld [vmem:[#allocation7 + $0xa8] sm:$0xff]
    %v92 = vld [vmem:[#allocation7 + $0xb0] sm:$0xff]
    %v93 = vld [vmem:[#allocation7 + $0xb8] sm:$0xff]
    %v94 = vld [vmem:[#allocation7 + $0xc0] sm:$0xff]
    %v95 = vld [vmem:[#allocation7 + $0xc8] sm:$0xff]
    %v96 = vld [vmem:[#allocation7 + $0xd0] sm:$0xff]
    %v97 = vld [vmem:[#allocation7 + $0xd8] sm:$0xff]
    %v98 = vld [vmem:[#allocation7 + $0xe0] sm:$0xff]
    %v99 = vld [vmem:[#allocation7 + $0xe8] sm:$0xff]
    %v100 = vld [vmem:[#allocation7 + $0xf0] sm:$0xff]
    %v101 = vld [vmem:[#allocation7 + $0xf8] sm:$0xff]
    %v102 = vld [vmem:[#allocation7 + $0x100] sm:$0xff]
    %v103 = vld [vmem:[#allocation7 + $0x108] sm:$0xff]
    %v104 = vld [vmem:[#allocation7 + $0x110] sm:$0xff]
    %v105 = vld [vmem:[#allocation7 + $0x118] sm:$0xff]
    %v106 = vld [vmem:[#allocation7 + $0x120] sm:$0xff]
    %v107 = vld [vmem:[#allocation7 + $0x128] sm:$0xff]
    %v108 = vld [vmem:[#allocation7 + $0x130] sm:$0xff]
    %v109 = vld [vmem:[#allocation7 + $0x138] sm:$0xff]
    %v110 = vld [vmem:[#allocation7 + $0x140] sm:$0xff]
    %v111 = vld [vmem:[#allocation7 + $0x148] sm:$0xff]
    %v112 = vld [vmem:[#allocation7 + $0x150] sm:$0xff]
    %v113 = vld [vmem:[#allocation7 + $0x158] sm:$0xff]
    %v114 = vld [vmem:[#allocation7 + $0x160] sm:$0xff]
    %v115 = vld [vmem:[#allocation7 + $0x168] sm:$0xff]
    %v116 = vld [vmem:[#allocation7 + $0x170] sm:$0xff]
    %v117 = vld [vmem:[#allocation7 + $0x178] sm:$0xff]
    %v118 = vld [vmem:[#allocation7 + $0x180] sm:$0xff]
    %v119 = vld [vmem:[#allocation7 + $0x188] sm:$0xff]
    %v120 = vld [vmem:[#allocation7 + $0x190] sm:$0xff]
    %v121 = vld [vmem:[#allocation7 + $0x198] sm:$0xff]
    %v122 = vld [vmem:[#allocation7 + $0x1a0] sm:$0xff]
    %v123 = vld [vmem:[#allocation7 + $0x1a8] sm:$0xff]
    %v124 = vld [vmem:[#allocation7 + $0x1b0] sm:$0xff]
    %v125 = vld [vmem:[#allocation7 + $0x1b8] sm:$0xff]
    %v126 = vld [vmem:[#allocation7 + $0x1c0] sm:$0xff]
    %v127 = vld [vmem:[#allocation7 + $0x1c8] sm:$0xff]
    %v128 = vld [vmem:[#allocation7 + $0x1d0] sm:$0xff]
    %v129 = vld [vmem:[#allocation7 + $0x1d8] sm:$0xff]
    %v130 = vld [vmem:[#allocation7 + $0x1e0] sm:$0xff]
    %v131 = vld [vmem:[#allocation7 + $0x1e8] sm:$0xff]
    %v132 = vld [vmem:[#allocation7 + $0x1f0] sm:$0xff]
    %v133 = vld [vmem:[#allocation7 + $0x1f8] sm:$0xff]
    %v134 = vld [vmem:[%s5] sm:$0xf]
    %v135 = vpack.c.bf16 %v67, %v67
    %v137 = vlaneseq
    %v138 = vshrl.u32 %v137, 7
    %v139 = vsub.s32 0, %v138
    %v140 = vrot.slane %v134, %v139
    %v141 = vlaneseq
    %v142 = vshrl.u32 %v141, 7
    %v143 = vsub.s32 1, %v142
    %v144 = vrot.slane %v134, %v143
    %v145 = vlaneseq
    %v146 = vshrl.u32 %v145, 7
    %v147 = vsub.s32 2, %v146
    %v148 = vrot.slane %v134, %v147
    %v149 = vlaneseq
    %v150 = vshrl.u32 %v149, 7
    %v151 = vsub.s32 3, %v150
    %v152 = vrot.slane %v134, %v151
    %v221 = vunpack.c.l.b16 %v70
    %v222 = vunpack.c.h.b16 %v70
    %v223 = vunpack.c.l.b16 %v71
    %v224 = vunpack.c.h.b16 %v71
    %v225 = vunpack.c.l.b16 %v72
    %v226 = vunpack.c.h.b16 %v72
    %v227 = vunpack.c.l.b16 %v73
    %v228 = vunpack.c.h.b16 %v73
    %v229 = vunpack.c.l.b16 %v74
    %v230 = vunpack.c.h.b16 %v74
    %v231 = vunpack.c.l.b16 %v75
    %v232 = vunpack.c.h.b16 %v75
    %v233 = vunpack.c.l.b16 %v76
    %v234 = vunpack.c.h.b16 %v76
    %v235 = vunpack.c.l.b16 %v77
    %v236 = vunpack.c.h.b16 %v77
    %v237 = vunpack.c.l.b16 %v78
    %v238 = vunpack.c.h.b16 %v78
    %v239 = vunpack.c.l.b16 %v79
    %v240 = vunpack.c.h.b16 %v79
    %v241 = vunpack.c.l.b16 %v80
    %v242 = vunpack.c.h.b16 %v80
    %v243 = vunpack.c.l.b16 %v81
    %v244 = vunpack.c.h.b16 %v81
    %v245 = vunpack.c.l.b16 %v82
    %v246 = vunpack.c.h.b16 %v82
    %v247 = vunpack.c.l.b16 %v83
    %v248 = vunpack.c.h.b16 %v83
    %v249 = vunpack.c.l.b16 %v84
    %v250 = vunpack.c.h.b16 %v84
    %v251 = vunpack.c.l.b16 %v85
    %v252 = vunpack.c.h.b16 %v85
    %v253 = vunpack.c.l.b16 %v86
    %v254 = vunpack.c.h.b16 %v86
    %v255 = vunpack.c.l.b16 %v87
    %v256 = vunpack.c.h.b16 %v87
    %v257 = vunpack.c.l.b16 %v88
    %v258 = vunpack.c.h.b16 %v88
    %v259 = vunpack.c.l.b16 %v89
    %v260 = vunpack.c.h.b16 %v89
    %v261 = vunpack.c.l.b16 %v90
    %v262 = vunpack.c.h.b16 %v90
    %v263 = vunpack.c.l.b16 %v91
    %v264 = vunpack.c.h.b16 %v91
    %v265 = vunpack.c.l.b16 %v92
    %v266 = vunpack.c.h.b16 %v92
    %v267 = vunpack.c.l.b16 %v93
    %v268 = vunpack.c.h.b16 %v93
    %v269 = vunpack.c.l.b16 %v94
    %v270 = vunpack.c.h.b16 %v94
    %v271 = vunpack.c.l.b16 %v95
    %v272 = vunpack.c.h.b16 %v95
    %v273 = vunpack.c.l.b16 %v96
    %v274 = vunpack.c.h.b16 %v96
    %v275 = vunpack.c.l.b16 %v97
    %v276 = vunpack.c.h.b16 %v97
    %v277 = vunpack.c.l.b16 %v98
    %v278 = vunpack.c.h.b16 %v98
    %v279 = vunpack.c.l.b16 %v99
    %v280 = vunpack.c.h.b16 %v99
    %v281 = vunpack.c.l.b16 %v100
    %v282 = vunpack.c.h.b16 %v100
    %v283 = vunpack.c.l.b16 %v101
    %v284 = vunpack.c.h.b16 %v101
    %v285 = vunpack.c.l.b16 %v102
    %v286 = vunpack.c.h.b16 %v102
    %v287 = vunpack.c.l.b16 %v103
    %v288 = vunpack.c.h.b16 %v103
    %v289 = vunpack.c.l.b16 %v104
    %v290 = vunpack.c.h.b16 %v104
    %v291 = vunpack.c.l.b16 %v105
    %v292 = vunpack.c.h.b16 %v105
    %v293 = vunpack.c.l.b16 %v106
    %v294 = vunpack.c.h.b16 %v106
    %v295 = vunpack.c.l.b16 %v107
    %v296 = vunpack.c.h.b16 %v107
    %v297 = vunpack.c.l.b16 %v108
    %v298 = vunpack.c.h.b16 %v108
    %v299 = vunpack.c.l.b16 %v109
    %v300 = vunpack.c.h.b16 %v109
    %v301 = vunpack.c.l.b16 %v110
    %v302 = vunpack.c.h.b16 %v110
    %v303 = vunpack.c.l.b16 %v111
    %v304 = vunpack.c.h.b16 %v111
    %v305 = vunpack.c.l.b16 %v112
    %v306 = vunpack.c.h.b16 %v112
    %v307 = vunpack.c.l.b16 %v113
    %v308 = vunpack.c.h.b16 %v113
    %v309 = vunpack.c.l.b16 %v114
    %v310 = vunpack.c.h.b16 %v114
    %v311 = vunpack.c.l.b16 %v115
    %v312 = vunpack.c.h.b16 %v115
    %v313 = vunpack.c.l.b16 %v116
    %v314 = vunpack.c.h.b16 %v116
    %v315 = vunpack.c.l.b16 %v117
    %v316 = vunpack.c.h.b16 %v117
    %v317 = vunpack.c.l.b16 %v118
    %v318 = vunpack.c.h.b16 %v118
    %v319 = vunpack.c.l.b16 %v119
    %v320 = vunpack.c.h.b16 %v119
    %v321 = vunpack.c.l.b16 %v120
    %v322 = vunpack.c.h.b16 %v120
    %v323 = vunpack.c.l.b16 %v121
    %v324 = vunpack.c.h.b16 %v121
    %v325 = vunpack.c.l.b16 %v122
    %v326 = vunpack.c.h.b16 %v122
    %v327 = vunpack.c.l.b16 %v123
    %v328 = vunpack.c.h.b16 %v123
    %v329 = vunpack.c.l.b16 %v124
    %v330 = vunpack.c.h.b16 %v124
    %v331 = vunpack.c.l.b16 %v125
    %v332 = vunpack.c.h.b16 %v125
    %v333 = vunpack.c.l.b16 %v126
    %v334 = vunpack.c.h.b16 %v126
    %v335 = vunpack.c.l.b16 %v127
    %v336 = vunpack.c.h.b16 %v127
    %v337 = vunpack.c.l.b16 %v128
    %v338 = vunpack.c.h.b16 %v128
    %v339 = vunpack.c.l.b16 %v129
    %v340 = vunpack.c.h.b16 %v129
    %v341 = vunpack.c.l.b16 %v130
    %v342 = vunpack.c.h.b16 %v130
    %v343 = vunpack.c.l.b16 %v131
    %v344 = vunpack.c.h.b16 %v131
    %v345 = vunpack.c.l.b16 %v132
    %v346 = vunpack.c.h.b16 %v132
    %v347 = vunpack.c.l.b16 %v133
    %v348 = vunpack.c.h.b16 %v133
    %v349 = vpack.c.b16 %v225, %v221
    %v350 = vpack.c.b16 %v226, %v222
    %v351 = vpack.c.b16 %v227, %v223
    %v352 = vpack.c.b16 %v228, %v224
    %v353 = vpack.c.b16 %v233, %v229
    %v354 = vpack.c.b16 %v234, %v230
    %v355 = vpack.c.b16 %v235, %v231
    %v356 = vpack.c.b16 %v236, %v232
    %v357 = vpack.c.b16 %v241, %v237
    %v358 = vpack.c.b16 %v242, %v238
    %v359 = vpack.c.b16 %v243, %v239
    %v360 = vpack.c.b16 %v244, %v240
    %v361 = vpack.c.b16 %v249, %v245
    %v362 = vpack.c.b16 %v250, %v246
    %v363 = vpack.c.b16 %v251, %v247
    %v364 = vpack.c.b16 %v252, %v248
    %v365 = vpack.c.b16 %v257, %v253
    %v366 = vpack.c.b16 %v258, %v254
    %v367 = vpack.c.b16 %v259, %v255
    %v368 = vpack.c.b16 %v260, %v256
    %v369 = vpack.c.b16 %v265, %v261
    %v370 = vpack.c.b16 %v266, %v262
    %v371 = vpack.c.b16 %v267, %v263
    %v372 = vpack.c.b16 %v268, %v264
    %v373 = vpack.c.b16 %v273, %v269
    %v374 = vpack.c.b16 %v274, %v270
    %v375 = vpack.c.b16 %v275, %v271
    %v376 = vpack.c.b16 %v276, %v272
    %v377 = vpack.c.b16 %v281, %v277
    %v378 = vpack.c.b16 %v282, %v278
    %v379 = vpack.c.b16 %v283, %v279
    %v380 = vpack.c.b16 %v284, %v280
    %v381 = vpack.c.b16 %v289, %v285
    %v382 = vpack.c.b16 %v290, %v286
    %v383 = vpack.c.b16 %v291, %v287
    %v384 = vpack.c.b16 %v292, %v288
    %v385 = vpack.c.b16 %v297, %v293
    %v386 = vpack.c.b16 %v298, %v294
    %v387 = vpack.c.b16 %v299, %v295
    %v388 = vpack.c.b16 %v300, %v296
    %v389 = vpack.c.b16 %v305, %v301
    %v390 = vpack.c.b16 %v306, %v302
    %v391 = vpack.c.b16 %v307, %v303
    %v392 = vpack.c.b16 %v308, %v304
    %v393 = vpack.c.b16 %v313, %v309
    %v394 = vpack.c.b16 %v314, %v310
    %v395 = vpack.c.b16 %v315, %v311
    %v396 = vpack.c.b16 %v316, %v312
    %v397 = vpack.c.b16 %v321, %v317
    %v398 = vpack.c.b16 %v322, %v318
    %v399 = vpack.c.b16 %v323, %v319
    %v400 = vpack.c.b16 %v324, %v320
    %v401 = vpack.c.b16 %v329, %v325
    %v402 = vpack.c.b16 %v330, %v326
    %v403 = vpack.c.b16 %v331, %v327
    %v404 = vpack.c.b16 %v332, %v328
    %v405 = vpack.c.b16 %v337, %v333
    %v406 = vpack.c.b16 %v338, %v334
    %v407 = vpack.c.b16 %v339, %v335
    %v408 = vpack.c.b16 %v340, %v336
    %v409 = vpack.c.b16 %v345, %v341
    %v410 = vpack.c.b16 %v346, %v342
    %v411 = vpack.c.b16 %v347, %v343
    %v412 = vpack.c.b16 %v348, %v344
    %477 = vmatprep.subr.bf16.mxu0 %v378
    %478 = vmatpush1.bf16.msra.mxu0 %v377
    %479 = vmatprep.subr.bf16.mxu0 %v374
    %480 = vmatpush1.bf16.msra.mxu0 %v373
    %481 = vmatprep.subr.bf16.mxu0 %v370
    %482 = vmatpush1.bf16.msra.mxu0 %v369
    %483 = vmatprep.subr.bf16.mxu0 %v366
    %484 = vmatpush1.bf16.msra.mxu0 %v365
    %485 = vmatprep.subr.bf16.mxu0 %v362
    %486 = vmatpush1.bf16.msra.mxu0 %v361
    %487 = vmatprep.subr.bf16.mxu0 %v358
    %488 = vmatpush1.bf16.msra.mxu0 %v357
    %489 = vmatprep.subr.bf16.mxu0 %v354
    %490 = vmatpush1.bf16.msra.mxu0 %v353
    %491 = vmatprep.subr.bf16.mxu0 %v350
    %492 = vmatpush1.bf16.msra.mxu0 %v349
    %493 = vmatprep.subr.bf16.mxu0 %v410
    %494 = vmatpush2.bf16.msra.mxu0 %v409
    %495 = vmatprep.subr.bf16.mxu0 %v406
    %496 = vmatpush2.bf16.msra.mxu0 %v405
    %497 = vmatprep.subr.bf16.mxu0 %v402
    %498 = vmatpush2.bf16.msra.mxu0 %v401
    %499 = vmatprep.subr.bf16.mxu0 %v398
    %500 = vmatpush2.bf16.msra.mxu0 %v397
    %501 = vmatprep.subr.bf16.mxu0 %v394
    %502 = vmatpush2.bf16.msra.mxu0 %v393
    %503 = vmatprep.subr.bf16.mxu0 %v390
    %504 = vmatpush2.bf16.msra.mxu0 %v389
    %505 = vmatprep.subr.bf16.mxu0 %v386
    %506 = vmatpush2.bf16.msra.mxu0 %v385
    %507 = vmatprep.subr.bf16.mxu0 %v382
    %508 = vmatpush2.bf16.msra.mxu0 %v381
    %509 = vmatprep.mubr.bf16.mxu0 %v135
    %510 = vmatmul.mubr.bf16.gmra.mxu0 %v66
    %v511 = vpop.f32.mrf.mxu0
    %v512 = vadd.f32 %v140, %v511
    %v513 = vpop.f32.mrf.mxu0
    %v514 = vadd.f32 %v144, %v513
    %v515 = vpop.f32.mrf.mxu0
    %v516 = vpop.f32.mrf.mxu0
    %517 = vdwg.mxu0
    %518 = vmatprep.subr.bf16.mxu0 %v380
    %519 = vmatpush1.bf16.msra.mxu0 %v379
    %520 = vmatprep.subr.bf16.mxu0 %v376
    %521 = vmatpush1.bf16.msra.mxu0 %v375
    %522 = vmatprep.subr.bf16.mxu0 %v372
    %523 = vmatpush1.bf16.msra.mxu0 %v371
    %524 = vmatprep.subr.bf16.mxu0 %v368
    %525 = vmatpush1.bf16.msra.mxu0 %v367
    %526 = vmatprep.subr.bf16.mxu0 %v364
    %527 = vmatpush1.bf16.msra.mxu0 %v363
    %528 = vmatprep.subr.bf16.mxu0 %v360
    %529 = vmatpush1.bf16.msra.mxu0 %v359
    %530 = vmatprep.subr.bf16.mxu0 %v356
    %531 = vmatpush1.bf16.msra.mxu0 %v355
    %532 = vmatprep.subr.bf16.mxu0 %v352
    %533 = vmatpush1.bf16.msra.mxu0 %v351
    %534 = vmatprep.subr.bf16.mxu0 %v412
    %535 = vmatpush2.bf16.msra.mxu0 %v411
    %536 = vmatprep.subr.bf16.mxu0 %v408
    %537 = vmatpush2.bf16.msra.mxu0 %v407
    %538 = vmatprep.subr.bf16.mxu0 %v404
    %539 = vmatpush2.bf16.msra.mxu0 %v403
    %540 = vmatprep.subr.bf16.mxu0 %v400
    %541 = vmatpush2.bf16.msra.mxu0 %v399
    %542 = vmatprep.subr.bf16.mxu0 %v396
    %543 = vmatpush2.bf16.msra.mxu0 %v395
    %544 = vmatprep.subr.bf16.mxu0 %v392
    %545 = vmatpush2.bf16.msra.mxu0 %v391
    %546 = vmatprep.subr.bf16.mxu0 %v388
    %547 = vmatpush2.bf16.msra.mxu0 %v387
    %548 = vmatprep.subr.bf16.mxu0 %v384
    %549 = vmatpush2.bf16.msra.mxu0 %v383
    %550 = vmatprep.mubr.bf16.mxu0 %v135
    %551 = vmatmul.mubr.bf16.gmra.mxu0 %v66
    %v552 = vpop.f32.mrf.mxu0
    %v553 = vadd.f32 %v148, %v552
    %v554 = vpop.f32.mrf.mxu0
    %v555 = vadd.f32 %v152, %v554
    %v556 = vpop.f32.mrf.mxu0
    %v557 = vpop.f32.mrf.mxu0
    %558 = vdwg.mxu0
    %v559 = vpack.c.bf16 %v512, %v512
    %v560 = vpack.c.bf16 %v514, %v514
    %v561 = vpack.c.bf16 %v553, %v553
    %v562 = vpack.c.bf16 %v555, %v555
    %v563 = vxor.u32 %v559, 2147516416
    %v565 = vmul.bf16 %v563, 1069105081
    %v566 = vpow.bf16.pop %v565
    %v567 = vadd.bf16 %v566, 1065369472
    %v568 = vrcp.bf16.pop %v567
    %v569 = vmul.bf16 1065369472, %v568
    %v570 = vunpack.c.l.bf16 %v569
    %v571 = vmul.f32 %v570, %v68
    %v572 = vxor.u32 %v560, 2147516416
    %v574 = vmul.bf16 %v572, 1069105081
    %v575 = vpow.bf16.pop %v574
    %v576 = vadd.bf16 %v575, 1065369472
    %v577 = vrcp.bf16.pop %v576
    %v578 = vmul.bf16 1065369472, %v577
    %v579 = vtanh.bf16.pop %v562
    %v580 = vmul.bf16 %v578, %v579
    %v581 = vunpack.c.l.bf16 %v580
    %v582 = vadd.f32 %v571, %v581
    %584 = vset.pattern.permute.xlu0 0
    %585 = vperm.xlu0 %584, %v69
    %v586 = vpop.permute.xlu0 %585
    %v588 = vmul.f32 %v582, %v586
    %v589 = vsub.f32 1.0, %v69
    %591 = vset.pattern.permute.xlu0 0
    %592 = vperm.xlu0 %591, %v589
    %v593 = vpop.permute.xlu0 %592
    %v595 = vmul.f32 %v68, %v593
    %v596 = vadd.f32 %v588, %v595
    %v597 = vxor.u32 %v561, 2147516416
    %v599 = vmul.bf16 %v597, 1069105081
    %v600 = vpow.bf16.pop %v599
    %v601 = vadd.bf16 %v600, 1065369472
    %v602 = vrcp.bf16.pop %v601
    %v603 = vmul.bf16 1065369472, %v602
    %v604 = vtanh.pop %v596
    %v605 = vunpack.c.l.bf16 %v603
    %v606 = vmul.f32 %v605, %v604
    %v607 = vmul.f32 %v606, %v586
    %v608 = vmul.f32 %v67, %v593
    %v609 = vadd.f32 %v607, %v608
    %610 = vst [vmem:[#allocation8] sm:$0xff] %v609
    %611 = vst [vmem:[#allocation9] sm:$0xff] %v596
    // Predicated region
    $region38: #{tpu_custom_call.1} parent=1 // pred_check
      _
    $region39: #{tpu_custom_call.1} parent=1 // pred_check_branch
      %613 = sbr.rel (0) target = $region41
    $region40: #{tpu_custom_call.1} parent=1 // pred_region
      %s615 = ssub.s32 128, 128
      %616 = vsyncadd [#allocation4], %s615
      %s618 = sshll.u32 [#allocation8], 4
      %s619 = int_to_ptr.vmem [resolvable:$true] %s618
      %621 = dma.vmem_to_hbm [thread:$0]  %s619, 128, %s6, [#allocation4]
    $region41: #{tpu_custom_call.1} parent=1 // pred_fallthru
      _
    // Predicated region
    $region42: #{tpu_custom_call.1} parent=1 // pred_check
      _
    $region43: #{tpu_custom_call.1} parent=1 // pred_check_branch
      %623 = sbr.rel (0) target = $region45
    $region44: #{tpu_custom_call.1} parent=1 // pred_region
      %s625 = ssub.s32 128, 128
      %626 = vsyncadd [#allocation10], %s625
      %s628 = sshll.u32 [#allocation9], 4
      %s629 = int_to_ptr.vmem [resolvable:$true] %s628
      %631 = dma.vmem_to_hbm [thread:$0]  %s629, 128, %s7, [#allocation10]
    $region45: #{tpu_custom_call.1} parent=1 // pred_fallthru
      _
    // Predicated region
    $region46: #{tpu_custom_call.1} parent=1 // pred_check
      _
    $region47: #{tpu_custom_call.1} parent=1 // pred_check_branch
      %633 = sbr.rel (0) target = $region49
    $region48: #{tpu_custom_call.1} parent=1 // pred_region
      %634 = dma.done [#allocation4], 128
    $region49: #{tpu_custom_call.1} parent=1 // pred_fallthru
      _
    // Predicated region
    $region50: #{tpu_custom_call.1} parent=1 // pred_check
      _
    $region51: #{tpu_custom_call.1} parent=1 // pred_check_branch
      %636 = sbr.rel (0) target = $region53
    $region52: #{tpu_custom_call.1} parent=1 // pred_region
      %637 = dma.done [#allocation10], 128
    $region53: #{tpu_custom_call.1} parent=1 // pred_fallthru
      _
    %638 = vsyncpa [#allocation3], 1
    %639 = vsyncpa [#allocation6], 1
    %640 = vsyncpa [#allocation4], 1
    %641 = vsyncpa [#allocation10], 1

</llo_original>
